<compile_context>
chip_gen: v5e
topology: v5e:2x2
jax: 0.10.0
libtpu: 0.0.40
codegen_flags: <defaults>
</compile_context>

<pallas_src>
import functools

import jax
import jax.numpy as jnp
from jax.experimental import pallas as pl
from jax.experimental.pallas import tpu as pltpu

LEAKY_SLOPE = 0.01
BN_EPS = 1e-5

_LANE = 128
_VMEM_LIMIT = 48 * 1024 * 1024     # scoped-VMEM request (< 64 MiB physical on v7x)
_TILE_BUDGET = 20 * 1024 * 1024    # budget for double-buffered per-step tiles + weights
_FUSED_BUDGET = 36 * 1024 * 1024   # total footprint budget for the fused 3-pass path
_SMALL_BYTES = 4 * 1024 * 1024     # below this, run the single grid-less fused call


def _round_up(x, m):
    return (x + m - 1) // m * m


def _leaky_relu(x):
    return jnp.where(x > 0, x, LEAKY_SLOPE * x)


def _scale_shift(stats, gb, f):
    """Fold batch stats (1, 2f) = [E[z] | E[z^2]] and gamma/beta (2, f) into a
    single per-feature scale/shift so BN is `z*a + c` (2 VPU ops / element).
    All math in f32 (single-pass variance; inputs are BN-scale activations so
    cancellation is benign, but keep it out of bf16)."""
    mean = stats[:, :f]
    var = stats[:, f:] - mean * mean            # biased batch variance
    a = gb[0:1, :] * jax.lax.rsqrt(var + BN_EPS)
    c = gb[1:2, :] - mean * a
    return a, c


def _masked_mean_rows(tile_idx, tb, n_valid, inv_n):
    """(1, tb) row-weight vector: 1/B for real batch rows, 0 for padded rows.
    Used as the LHS of an MXU reduction over the (padded) batch axis."""
    lanes = jax.lax.broadcasted_iota(jnp.int32, (1, tb), 1) + tile_idx * tb
    return jnp.where(lanes < n_valid, inv_n, 0.0).astype(jnp.float32)


# ---------------------------------------------------------------------------
# Path A: tiny problems -> one grid-less, fully VMEM-resident call (f32).
# ---------------------------------------------------------------------------
def _fused_small_kernel(x_ref, w1_ref, gb1_ref, w2_ref, gb2_ref, w3_ref, b3_ref,
                        out_ref):
    def bn_leaky(z, gb):
        m = jnp.mean(z, axis=0, keepdims=True)
        v = jnp.mean(z * z, axis=0, keepdims=True) - m * m
        a = gb[0:1, :] * jax.lax.rsqrt(v + BN_EPS)
        c = gb[1:2, :] - m * a
        return _leaky_relu(z * a + c)

    z1 = jnp.dot(x_ref[...], w1_ref[...], preferred_element_type=jnp.float32)
    h1 = bn_leaky(z1, gb1_ref[...])
    z2 = jnp.dot(h1, w2_ref[...], preferred_element_type=jnp.float32)
    h2 = bn_leaky(z2, gb2_ref[...])
    # (1, H) contracted with (B, H) along H -> (1, B): batch on the lane axis.
    out = jax.lax.dot_general(w3_ref[...], h2, (((1,), (1,)), ((), ())),
                              preferred_element_type=jnp.float32)
    out_ref[...] = out + b3_ref[...]


# ---------------------------------------------------------------------------
# Path C (primary tiled path): fused 3-pass kernel, grid = (3, num_tiles).
# ---------------------------------------------------------------------------
def _fused_tiled_kernel(x_ref, w1_ref, gb1_ref, w2_ref, gb2_ref, w3_ref, b3_ref,
                        out_ref, z2_buf, stats1, stats2,
                        *, tb, h2p, hp, n_valid, inv_n):
    p = pl.program_id(0)     # pass: 0 = BN1 stats, 1 = z2 + BN2 stats, 2 = output
    i = pl.program_id(1)     # batch tile
    ones = _masked_mean_rows(i, tb, n_valid, inv_n)

    @pl.when(p == 0)
    def _pass0():
        @pl.when(i == 0)
        def _():
            stats1[...] = jnp.zeros_like(stats1)
        z1 = jnp.dot(x_ref[...], w1_ref[...], preferred_element_type=jnp.float32)
        zz = jnp.concatenate([z1, z1 * z1], axis=1)          # (tb, 2*h2p)
        stats1[...] += jnp.dot(ones, zz, preferred_element_type=jnp.float32)

    @pl.when(p == 1)
    def _pass1():
        @pl.when(i == 0)
        def _():
            stats2[...] = jnp.zeros_like(stats2)
        z1 = jnp.dot(x_ref[...], w1_ref[...], preferred_element_type=jnp.float32)
        a1, c1 = _scale_shift(stats1[...], gb1_ref[...], h2p)
        h1 = _leaky_relu(z1 * a1 + c1)
        z2 = jnp.dot(h1.astype(jnp.bfloat16), w2_ref[...],
                     preferred_element_type=jnp.float32)
        row = pl.multiple_of(i * tb, tb)
        z2_buf[pl.ds(row, tb), :] = z2.astype(jnp.bfloat16)   # stays in VMEM
        zz = jnp.concatenate([z2, z2 * z2], axis=1)           # (tb, 2*hp)
        stats2[...] += jnp.dot(ones, zz, preferred_element_type=jnp.float32)

    @pl.when(p == 2)
    def _pass2():
        a2, c2 = _scale_shift(stats2[...], gb2_ref[...], hp)
        row = pl.multiple_of(i * tb, tb)
        h2 = _leaky_relu(z2_buf[pl.ds(row, tb), :].astype(jnp.float32) * a2 + c2)
        out = jax.lax.dot_general(w3_ref[...], h2, (((1,), (1,)), ((), ())),
                                  preferred_element_type=jnp.float32)
        out_ref[...] = out + b3_ref[0, 0]


# ---------------------------------------------------------------------------
# Path B (fallback for very large B*H): staged 3-call pipeline, bf16 z1/z2.
# ---------------------------------------------------------------------------
def _lin_stats_kernel(x_ref, w_ref, z_ref, stats_ref, *, tb, n_valid, inv_n):
    i = pl.program_id(0)
    z = jnp.dot(x_ref[...], w_ref[...], preferred_element_type=jnp.float32)
    z_ref[...] = z.astype(jnp.bfloat16)

    @pl.when(i == 0)
    def _():
        stats_ref[...] = jnp.zeros_like(stats_ref)

    ones = _masked_mean_rows(i, tb, n_valid, inv_n)
    zz = jnp.concatenate([z, z * z], axis=1)
    stats_ref[...] += jnp.dot(ones, zz, preferred_element_type=jnp.float32)


def _bn_lin_stats_kernel(z_ref, stats_in_ref, gb_ref, w_ref, z2_ref, stats_out_ref,
                         *, tb, f_in, n_valid, inv_n):
    i = pl.program_id(0)
    a, c = _scale_shift(stats_in_ref[...], gb_ref[...], f_in)
    h = _leaky_relu(z_ref[...].astype(jnp.float32) * a + c)
    z2 = jnp.dot(h.astype(jnp.bfloat16), w_ref[...],
                 preferred_element_type=jnp.float32)
    z2_ref[...] = z2.astype(jnp.bfloat16)

    @pl.when(i == 0)
    def _():
        stats_out_ref[...] = jnp.zeros_like(stats_out_ref)

    ones = _masked_mean_rows(i, tb, n_valid, inv_n)
    zz = jnp.concatenate([z2, z2 * z2], axis=1)
    stats_out_ref[...] += jnp.dot(ones, zz, preferred_element_type=jnp.float32)


def _bn_proj_kernel(z_ref, stats_ref, gb_ref, w3_ref, b3_ref, out_ref, *, f_in):
    a, c = _scale_shift(stats_ref[...], gb_ref[...], f_in)
    h = _leaky_relu(z_ref[...].astype(jnp.float32) * a + c)
    out = jax.lax.dot_general(w3_ref[...], h, (((1,), (1,)), ((), ())),
                              preferred_element_type=jnp.float32)
    out_ref[...] = out + b3_ref[0, 0]


# ---------------------------------------------------------------------------
# Wrappers
# ---------------------------------------------------------------------------
def _pad2(a, rows, cols, dtype):
    out = jnp.zeros((rows, cols), dtype)
    return out.at[:a.shape[0], :a.shape[1]].set(a.astype(dtype))


def _pick_batch_tile(b, dp, h2p, hp):
    """Largest 128-multiple batch tile that (a) fits the double-buffered tile +
    weight budget and (b) minimizes padding of the batch."""
    cap = _round_up(b, _LANE)
    weight_bytes = 2 * 2 * (dp * h2p + h2p * hp)          # double-buffered bf16 weights
    best_tb, best_bp = _LANE, _round_up(b, _LANE)
    for cand in (128, 256, 384, 512, 768, 1024, 1536, 2048):
        if cand > cap:
            break
        tile_bytes = 2 * 2 * cand * (dp + h2p + hp)        # double-buffered bf16 tiles
        if weight_bytes + tile_bytes > _TILE_BUDGET:
            break
        bp = _round_up(b, cand)
        if bp <= best_bp:                                  # least padding; ties -> bigger tile
            best_tb, best_bp = cand, bp
    return best_tb


def _forward_small(x, p):
    batch = x.shape[0]
    out = pl.pallas_call(
        _fused_small_kernel,
        out_shape=jax.ShapeDtypeStruct((1, batch), jnp.float32),
    )(x, p["w1"], p["gb1"], p["w2"], p["gb2"], p["w3"], p["b3"])
    return out.reshape(-1)


def _forward_fused(xp, w1, gb1, w2, gb2, w3, b3,
                   n_valid, bp, dp, h2p, hp, tb, nb, inv_n):
    kernel = functools.partial(_fused_tiled_kernel, tb=tb, h2p=h2p, hp=hp,
                               n_valid=n_valid, inv_n=inv_n)
    const = lambda p, i: (0, 0)
    out = pl.pallas_call(
        kernel,
        grid_spec=pltpu.PrefetchScalarGridSpec(
            num_scalar_prefetch=0,
            grid=(3, nb),
            in_specs=[
                # x is only needed in passes 0/1; pin pass 2 to block 0 so it is
                # not re-streamed from HBM during the output pass.
                pl.BlockSpec((tb, dp), lambda p, i: (jnp.where(p == 2, 0, i), 0)),
                pl.BlockSpec((dp, h2p), const),
                pl.BlockSpec((2, h2p), const),
                pl.BlockSpec((h2p, hp), const),
                pl.BlockSpec((2, hp), const),
                pl.BlockSpec((1, hp), const),
                pl.BlockSpec(memory_space=pltpu.MemorySpace.SMEM),   # b3 scalar
            ],
            out_specs=pl.BlockSpec((1, tb), lambda p, i: (0, i)),    # lane-dense
            scratch_shapes=[
                pltpu.VMEM((bp, hp), jnp.bfloat16),       # resident z2 (never hits HBM)
                pltpu.VMEM((1, 2 * h2p), jnp.float32),    # BN1 stats accumulator (f32)
                pltpu.VMEM((1, 2 * hp), jnp.float32),     # BN2 stats accumulator (f32)
            ],
        ),
        out_shape=jax.ShapeDtypeStruct((1, bp), jnp.float32),
        compiler_params=pltpu.CompilerParams(
            dimension_semantics=("arbitrary", "arbitrary"),
            vmem_limit_bytes=_VMEM_LIMIT),
    )(xp, w1, gb1, w2, gb2, w3, b3)
    return out.reshape(-1)[:n_valid]


def _forward_staged(xp, w1, gb1, w2, gb2, w3, b3,
                    n_valid, bp, dp, h2p, hp, tb, nb, inv_n):
    params_arb = pltpu.CompilerParams(dimension_semantics=("arbitrary",),
                                      vmem_limit_bytes=_VMEM_LIMIT)

    # Stage 1: z1 = x @ w1 (bf16 out) + BN1 stats accumulation.
    z1, stats1 = pl.pallas_call(
        functools.partial(_lin_stats_kernel, tb=tb, n_valid=n_valid, inv_n=inv_n),
        grid_spec=pltpu.PrefetchScalarGridSpec(
            num_scalar_prefetch=0,
            grid=(nb,),
            in_specs=[
                pl.BlockSpec((tb, dp), lambda i: (i, 0)),
                pl.BlockSpec((dp, h2p), lambda i: (0, 0)),
            ],
            out_specs=[
                pl.BlockSpec((tb, h2p), lambda i: (i, 0)),
                pl.BlockSpec((1, 2 * h2p), lambda i: (0, 0)),   # resident accumulator
            ],
        ),
        out_shape=(jax.ShapeDtypeStruct((bp, h2p), jnp.bfloat16),
                   jax.ShapeDtypeStruct((1, 2 * h2p), jnp.float32)),
        compiler_params=params_arb,
    )(xp, w1)

    # Stage 2: BN1 + LeakyReLU, z2 = h1 @ w2 (bf16 out) + BN2 stats.
    z2, stats2 = pl.pallas_call(
        functools.partial(_bn_lin_stats_kernel, tb=tb, f_in=h2p,
                          n_valid=n_valid, inv_n=inv_n),
        grid_spec=pltpu.PrefetchScalarGridSpec(
            num_scalar_prefetch=0,
            grid=(nb,),
            in_specs=[
                pl.BlockSpec((tb, h2p), lambda i: (i, 0)),
                pl.BlockSpec((1, 2 * h2p), lambda i: (0, 0)),
                pl.BlockSpec((2, h2p), lambda i: (0, 0)),
                pl.BlockSpec((h2p, hp), lambda i: (0, 0)),
            ],
            out_specs=[
                pl.BlockSpec((tb, hp), lambda i: (i, 0)),
                pl.BlockSpec((1, 2 * hp), lambda i: (0, 0)),
            ],
        ),
        out_shape=(jax.ShapeDtypeStruct((bp, hp), jnp.bfloat16),
                   jax.ShapeDtypeStruct((1, 2 * hp), jnp.float32)),
        compiler_params=params_arb,
    )(z1, stats1, gb1, w2)

    # Stage 3: BN2 + LeakyReLU, out = w3 . h2 + b3, lane-dense (1, tb) blocks.
    out = pl.pallas_call(
        functools.partial(_bn_proj_kernel, f_in=hp),
        grid_spec=pltpu.PrefetchScalarGridSpec(
            num_scalar_prefetch=0,
            grid=(nb,),
            in_specs=[
                pl.BlockSpec((tb, hp), lambda i: (i, 0)),
                pl.BlockSpec((1, 2 * hp), lambda i: (0, 0)),
                pl.BlockSpec((2, hp), lambda i: (0, 0)),
                pl.BlockSpec((1, hp), lambda i: (0, 0)),
                pl.BlockSpec(memory_space=pltpu.MemorySpace.SMEM),
            ],
            out_specs=pl.BlockSpec((1, tb), lambda i: (0, i)),
        ),
        out_shape=jax.ShapeDtypeStruct((1, bp), jnp.float32),
        compiler_params=pltpu.CompilerParams(dimension_semantics=("parallel",),
                                             vmem_limit_bytes=_VMEM_LIMIT),
    )(z2, stats2, gb2, w3, b3)

    return out.reshape(-1)[:n_valid]


def discriminator_forward(x, params, *, force_path=None):
    """x: (B, D) float32. Returns (B,) float32 (PyTorch `output.view(-1)`).
    force_path in {None, "small", "fused", "staged"} (explicit paths for testing)."""
    B, D = x.shape
    H2 = params["w1"].shape[1]
    H = params["w2"].shape[1]

    footprint = 4 * (B * (D + H2 + H) + D * H2 + H2 * H + 4 * (H2 + H))
    if force_path == "small" or (force_path is None and footprint <= _SMALL_BYTES):
        return _forward_small(x, params)

    # ---- lane padding of feature dims + tile padding of the batch ----
    dp, h2p, hp = (_round_up(d, _LANE) for d in (D, H2, H))
    tb = _pick_batch_tile(B, dp, h2p, hp)
    bp = _round_up(B, tb)
    nb = bp // tb
    inv_n = 1.0 / B

    xp = _pad2(x, bp, dp, jnp.bfloat16)
    w1 = _pad2(params["w1"], dp, h2p, jnp.bfloat16)
    w2 = _pad2(params["w2"], h2p, hp, jnp.bfloat16)
    w3 = _pad2(params["w3"], 1, hp, jnp.float32)
    gb1 = _pad2(params["gb1"], 2, h2p, jnp.float32)
    gb2 = _pad2(params["gb2"], 2, hp, jnp.float32)
    b3 = params["b3"].astype(jnp.float32)

    weight_bytes = 2 * 2 * (dp * h2p + h2p * hp)
    fused_bytes = (bp * hp * 2              # resident z2 scratch
                   + 2 * 2 * tb * dp        # double-buffered x tile
                   + weight_bytes
                   + 4 * (2 * h2p + 2 * hp) * 4
                   + (1 << 20))             # misc headroom
    if force_path == "staged" or (force_path != "fused" and fused_bytes > _FUSED_BUDGET):
        return _forward_staged(xp, w1, gb1, w2, gb2, w3, b3,
                               B, bp, dp, h2p, hp, tb, nb, inv_n)
    return _forward_fused(xp, w1, gb1, w2, gb2, w3, b3,
                          B, bp, dp, h2p, hp, tb, nb, inv_n)


# ---------------------------------------------------------------------------
# Params + pure-JAX reference
# ---------------------------------------------------------------------------
def init_params(key, input_size, hidden_size):
    """Synthetic parameters matching the PyTorch module shapes.  Linear weights
    stored (in, out); the last layer is kept as its natural (1, H) row.
    gamma/beta are packed into one (2, F) array per BN layer (non-trivial
    values so the tests exercise the affine BN path).  b1/b2 exist only for the
    reference: a pre-BN constant bias cancels inside BatchNorm, so the kernels
    drop them."""
    h2, h = 2 * hidden_size, hidden_size
    ks = jax.random.split(key, 10)

    def lin(kw, kb, fan_in, fan_out):
        bound = 1.0 / jnp.sqrt(fan_in)
        w = jax.random.uniform(kw, (fan_in, fan_out), jnp.float32, -bound, bound)
        b = jax.random.uniform(kb, (1, fan_out), jnp.float32, -bound, bound)
        return w, b

    w1, b1 = lin(ks[0], ks[1], input_size, h2)
    w2, b2 = lin(ks[2], ks[3], h2, h)
    w3, b3 = lin(ks[4], ks[5], h, 1)

    def gb(kg, kb_, f):
        gamma = jax.random.uniform(kg, (1, f), jnp.float32, 0.5, 1.5)
        beta = 0.1 * jax.random.normal(kb_, (1, f), jnp.float32)
        return jnp.concatenate([gamma, beta], axis=0)

    return {
        "w1": w1, "b1": b1, "gb1": gb(ks[6], ks[7], h2),
        "w2": w2, "b2": b2, "gb2": gb(ks[8], ks[9], h),
        "w3": w3.T,            # (1, H)
        "b3": b3,              # (1, 1)
    }


def reference_forward(x, p, cast_dtype=None):
    """Pure-JAX reference with PyTorch semantics (training-mode BN, biases kept).
    cast_dtype=jnp.bfloat16 models the kernels' bf16 matmul inputs so the tiled
    paths can be checked with a tight tolerance."""
    def cast(a):
        return a if cast_dtype is None else a.astype(cast_dtype).astype(jnp.float32)

    mm = functools.partial(jnp.dot, precision=jax.lax.Precision.HIGHEST)

    def bn(h, gb):
        m = h.mean(0, keepdims=True)
        v = ((h - m) ** 2).mean(0, keepdims=True)
        return (h - m) * jax.lax.rsqrt(v + BN_EPS) * gb[0:1] + gb[1:2]

    h = mm(cast(x), cast(p["w1"])) + p["b1"]
    h = _leaky_relu(bn(h, p["gb1"]))
    h = mm(cast(h), cast(p["w2"])) + p["b2"]
    h = _leaky_relu(bn(h, p["gb2"]))
    return (mm(h, p["w3"].T) + p["b3"]).reshape(-1)


if __name__ == "__main__":
    key = jax.random.PRNGKey(0)
    k1, k2, k3, k4 = jax.random.split(key, 4)

    # --- Small config: whole problem VMEM-resident, single fused call. -------
    B, INPUT_SIZE, HIDDEN_SIZE = 8, 32, 32
    x = jax.random.normal(k1, (B, INPUT_SIZE), jnp.float32)
    params = init_params(k2, INPUT_SIZE, HIDDEN_SIZE)

    out = jax.block_until_ready(discriminator_forward(x, params))
    ref = reference_forward(x, params)
    assert out.shape == (B,), out.shape
    assert jnp.allclose(out, ref, atol=3e-2, rtol=3e-2), \
        float(jnp.max(jnp.abs(out - ref)))

    # --- Tiled configs: odd sizes exercise feature padding, batch padding and
    #     the masked batch-stat reduction (B=520 -> 5 tiles of 128 rows). ------
    B2, D2, HID2 = 520, 48, 56
    x2 = jax.random.normal(k3, (B2, D2), jnp.float32)
    params2 = init_params(k4, D2, HID2)
    ref2 = reference_forward(x2, params2, cast_dtype=jnp.bfloat16)

    out_fused = jax.block_until_ready(
        discriminator_forward(x2, params2, force_path="fused"))
    assert out_fused.shape == (B2,), out_fused.shape
    assert jnp.allclose(out_fused, ref2, atol=4e-2, rtol=4e-2), \
        float(jnp.max(jnp.abs(out_fused - ref2)))

    out_staged = jax.block_until_ready(
        discriminator_forward(x2, params2, force_path="staged"))
    assert out_staged.shape == (B2,), out_staged.shape
    assert jnp.allclose(out_staged, ref2, atol=4e-2, rtol=4e-2), \
        float(jnp.max(jnp.abs(out_staged - ref2)))

    print("KERNEL_OK")
</pallas_src>

<mosaic_0001>
module attributes {stable_mosaic.version = 11 : i64} {
  func.func @_fused_small_kernel(%arg0: memref<8x32xf32, #tpu.memory_space<vmem>>, %arg1: memref<32x64xf32, #tpu.memory_space<vmem>>, %arg2: memref<2x64xf32, #tpu.memory_space<vmem>>, %arg3: memref<64x32xf32, #tpu.memory_space<vmem>>, %arg4: memref<2x32xf32, #tpu.memory_space<vmem>>, %arg5: memref<1x32xf32, #tpu.memory_space<vmem>>, %arg6: memref<1x1xf32, #tpu.memory_space<vmem>>, %arg7: memref<1x8xf32, #tpu.memory_space<vmem>>) attributes {dimension_semantics = [], scalar_prefetch = 0 : i64, scratch_operands = 0 : i64, tpu.core_type = #tpu.core_type<tc>} {
    %c0 = arith.constant 0 : index
    %c0_0 = arith.constant 0 : index
    %0 = vector.load %arg0[%c0, %c0_0] : memref<8x32xf32, #tpu.memory_space<vmem>>, vector<8x32xf32>
    %c0_1 = arith.constant 0 : index
    %c0_2 = arith.constant 0 : index
    %1 = vector.load %arg1[%c0_1, %c0_2] : memref<32x64xf32, #tpu.memory_space<vmem>>, vector<32x64xf32>
    %cst = arith.constant dense<0.000000e+00> : vector<8x64xf32>
    %2 = tpu.matmul %0, %1, %cst {dimension_numbers = #tpu.dot_dimension_numbers<[1], [0], [0], [1], [0, 0, 1, 1], [], []>} : vector<8x32xf32>, vector<32x64xf32>, vector<8x64xf32> -> vector<8x64xf32>
    %c0_3 = arith.constant 0 : index
    %c0_4 = arith.constant 0 : index
    %3 = vector.load %arg2[%c0_3, %c0_4] : memref<2x64xf32, #tpu.memory_space<vmem>>, vector<2x64xf32>
    %cst_5 = arith.constant dense<0.000000e+00> : vector<64xf32>
    %4 = vector.multi_reduction <add>, %2, %cst_5 [0] : vector<8x64xf32> to vector<64xf32>
    %5 = vector.shape_cast %4 : vector<64xf32> to vector<1x64xf32>
    %cst_6 = arith.constant 8.000000e+00 : f32
    %6 = vector.broadcast %cst_6 : f32 to vector<1x64xf32>
    %7 = arith.divf %5, %6 : vector<1x64xf32>
    %8 = arith.mulf %2, %2 : vector<8x64xf32>
    %cst_7 = arith.constant dense<0.000000e+00> : vector<64xf32>
    %9 = vector.multi_reduction <add>, %8, %cst_7 [0] : vector<8x64xf32> to vector<64xf32>
    %10 = vector.shape_cast %9 : vector<64xf32> to vector<1x64xf32>
    %cst_8 = arith.constant 8.000000e+00 : f32
    %11 = vector.broadcast %cst_8 : f32 to vector<1x64xf32>
    %12 = arith.divf %10, %11 : vector<1x64xf32>
    %13 = arith.mulf %7, %7 : vector<1x64xf32>
    %14 = arith.subf %12, %13 : vector<1x64xf32>
    %15 = vector.extract_strided_slice %3 {offsets = [0, 0], sizes = [1, 64], strides = [1, 1]} : vector<2x64xf32> to vector<1x64xf32>
    %cst_9 = arith.constant 9.99999974E-6 : f32
    %16 = vector.broadcast %cst_9 : f32 to vector<1x64xf32>
    %17 = arith.addf %14, %16 : vector<1x64xf32>
    %18 = math.rsqrt %17 : vector<1x64xf32>
    %19 = arith.mulf %15, %18 : vector<1x64xf32>
    %20 = vector.extract_strided_slice %3 {offsets = [1, 0], sizes = [1, 64], strides = [1, 1]} : vector<2x64xf32> to vector<1x64xf32>
    %21 = arith.mulf %7, %19 : vector<1x64xf32>
    %22 = arith.subf %20, %21 : vector<1x64xf32>
    %23 = vector.broadcast %19 : vector<1x64xf32> to vector<8x64xf32>
    %24 = arith.mulf %2, %23 : vector<8x64xf32>
    %25 = vector.broadcast %22 : vector<1x64xf32> to vector<8x64xf32>
    %26 = arith.addf %24, %25 : vector<8x64xf32>
    %cst_10 = arith.constant 0.000000e+00 : f32
    %27 = vector.broadcast %cst_10 : f32 to vector<8x64xf32>
    %28 = arith.cmpf ogt, %26, %27 : vector<8x64xf32>
    %cst_11 = arith.constant 0.00999999977 : f32
    %29 = vector.broadcast %cst_11 : f32 to vector<8x64xf32>
    %30 = arith.mulf %29, %26 : vector<8x64xf32>
    %31 = arith.select %28, %26, %30 : vector<8x64xi1>, vector<8x64xf32>
    %c0_12 = arith.constant 0 : index
    %c0_13 = arith.constant 0 : index
    %32 = vector.load %arg3[%c0_12, %c0_13] : memref<64x32xf32, #tpu.memory_space<vmem>>, vector<64x32xf32>
    %cst_14 = arith.constant dense<0.000000e+00> : vector<8x32xf32>
    %33 = tpu.matmul %31, %32, %cst_14 {dimension_numbers = #tpu.dot_dimension_numbers<[1], [0], [0], [1], [0, 0, 1, 1], [], []>} : vector<8x64xf32>, vector<64x32xf32>, vector<8x32xf32> -> vector<8x32xf32>
    %c0_15 = arith.constant 0 : index
    %c0_16 = arith.constant 0 : index
    %34 = vector.load %arg4[%c0_15, %c0_16] : memref<2x32xf32, #tpu.memory_space<vmem>>, vector<2x32xf32>
    %cst_17 = arith.constant dense<0.000000e+00> : vector<32xf32>
    %35 = vector.multi_reduction <add>, %33, %cst_17 [0] : vector<8x32xf32> to vector<32xf32>
    %36 = vector.shape_cast %35 : vector<32xf32> to vector<1x32xf32>
    %cst_18 = arith.constant 8.000000e+00 : f32
    %37 = vector.broadcast %cst_18 : f32 to vector<1x32xf32>
    %38 = arith.divf %36, %37 : vector<1x32xf32>
    %39 = arith.mulf %33, %33 : vector<8x32xf32>
    %cst_19 = arith.constant dense<0.000000e+00> : vector<32xf32>
    %40 = vector.multi_reduction <add>, %39, %cst_19 [0] : vector<8x32xf32> to vector<32xf32>
    %41 = vector.shape_cast %40 : vector<32xf32> to vector<1x32xf32>
    %cst_20 = arith.constant 8.000000e+00 : f32
    %42 = vector.broadcast %cst_20 : f32 to vector<1x32xf32>
    %43 = arith.divf %41, %42 : vector<1x32xf32>
    %44 = arith.mulf %38, %38 : vector<1x32xf32>
    %45 = arith.subf %43, %44 : vector<1x32xf32>
    %46 = vector.extract_strided_slice %34 {offsets = [0, 0], sizes = [1, 32], strides = [1, 1]} : vector<2x32xf32> to vector<1x32xf32>
    %cst_21 = arith.constant 9.99999974E-6 : f32
    %47 = vector.broadcast %cst_21 : f32 to vector<1x32xf32>
    %48 = arith.addf %45, %47 : vector<1x32xf32>
    %49 = math.rsqrt %48 : vector<1x32xf32>
    %50 = arith.mulf %46, %49 : vector<1x32xf32>
    %51 = vector.extract_strided_slice %34 {offsets = [1, 0], sizes = [1, 32], strides = [1, 1]} : vector<2x32xf32> to vector<1x32xf32>
    %52 = arith.mulf %38, %50 : vector<1x32xf32>
    %53 = arith.subf %51, %52 : vector<1x32xf32>
    %54 = vector.broadcast %50 : vector<1x32xf32> to vector<8x32xf32>
    %55 = arith.mulf %33, %54 : vector<8x32xf32>
    %56 = vector.broadcast %53 : vector<1x32xf32> to vector<8x32xf32>
    %57 = arith.addf %55, %56 : vector<8x32xf32>
    %cst_22 = arith.constant 0.000000e+00 : f32
    %58 = vector.broadcast %cst_22 : f32 to vector<8x32xf32>
    %59 = arith.cmpf ogt, %57, %58 : vector<8x32xf32>
    %cst_23 = arith.constant 0.00999999977 : f32
    %60 = vector.broadcast %cst_23 : f32 to vector<8x32xf32>
    %61 = arith.mulf %60, %57 : vector<8x32xf32>
    %62 = arith.select %59, %57, %61 : vector<8x32xi1>, vector<8x32xf32>
    %c0_24 = arith.constant 0 : index
    %c0_25 = arith.constant 0 : index
    %63 = vector.load %arg5[%c0_24, %c0_25] : memref<1x32xf32, #tpu.memory_space<vmem>>, vector<1x32xf32>
    %cst_26 = arith.constant dense<0.000000e+00> : vector<1x8xf32>
    %64 = tpu.matmul %63, %62, %cst_26 {dimension_numbers = #tpu.dot_dimension_numbers<[1], [1], [0], [0], [0, 0, 1, 0], [], []>} : vector<1x32xf32>, vector<8x32xf32>, vector<1x8xf32> -> vector<1x8xf32>
    %c0_27 = arith.constant 0 : index
    %c0_28 = arith.constant 0 : index
    %65 = vector.load %arg6[%c0_27, %c0_28] : memref<1x1xf32, #tpu.memory_space<vmem>>, vector<1x1xf32>
    %66 = vector.broadcast %65 : vector<1x1xf32> to vector<1x8xf32>
    %67 = arith.addf %64, %66 : vector<1x8xf32>
    %c0_29 = arith.constant 0 : index
    %c0_30 = arith.constant 0 : index
    %68 = vector.load %arg7[%c0_29, %c0_30] : memref<1x8xf32, #tpu.memory_space<vmem>>, vector<1x8xf32>
    tpu.vector_store %arg7[%c0_29, %c0_30], %67 {strides = array<i32>} : memref<1x8xf32, #tpu.memory_space<vmem>>, vector<1x8xf32>,
    return
  }
}

</mosaic_0001>

<llo_original>
// kernel: tpu_custom_call.1
$region0: #{tpu_custom_call.1}
  #allocation0 [shape = 'u32[]', space=smem, size = 0x4, offset = 0x4, fixed_abs, tag = 'smem constant byte address 0x4 - core index']
  #allocation1 [shape = 'u32[72,128]{1,0:T(1,128)}', space=vmem, size = 0x9000, scoped, tag = 'internal scratch']
  #allocation2 [shape = 'f32[1,1]{1,0:T(1,128)S(1)}', space=vmem, size = 0x200, scoped, tag = 'scoped memory for tpu_custom_call.1']
  %s0 = inlined_call_operand.vmem [shape: f32[8,32], index: 0, kind: input, shape index: {}]
  %s1 = inlined_call_operand.vmem [shape: f32[32,64], index: 1, kind: input, shape index: {}]
  %s2 = inlined_call_operand.vmem [shape: f32[2,64], index: 2, kind: input, shape index: {}]
  %s3 = inlined_call_operand.vmem [shape: f32[64,32], index: 3, kind: input, shape index: {}]
  %s4 = inlined_call_operand.vmem [shape: f32[2,32], index: 4, kind: input, shape index: {}]
  %s5 = inlined_call_operand.vmem [shape: f32[1,32], index: 5, kind: input, shape index: {}]
  %s6 = inlined_call_operand.<no memory space> [shape: f32[1,1], index: 6, kind: input, shape index: {}]
  %s7 = inlined_call_operand.hbm [shape: f32[1,8], index: 7, kind: output, shape index: {}]
  %s8 = sld [smem:[#allocation0]]
  $region38: #{tpu_custom_call.1} parent=0
    _
  %s10 = ssub.s32 1, %s8
  %s11 = scalar_select 0, %s10, %s8
  %v12 = vstv %s6
  %13 = vst [vmem:[#allocation2] sm:$0x1] %v12
  $region1: #{tpu_custom_call.1} parent=0
    #allocation3 [shape = 'u8[512]{0}', space=vmem, size = 0x400, scoped, tag = 'output window, operand 0, single buffered']
    #allocation4 [shape = 's32[1]{0}', space=sflag, size = 0x4, scoped, tag = 'scoped memory for tpu_custom_call.1']
    %14 = vsyncpa [#allocation4], 0
    // Predicated region
    $region2: #{tpu_custom_call.1} parent=1 // pred_check
      _
    $region3: #{tpu_custom_call.1} parent=1 // pred_check_branch
      %16 = sbr.rel (0) target = $region5
    $region4: #{tpu_custom_call.1} parent=1 // pred_region
      _
    $region5: #{tpu_custom_call.1} parent=1 // pred_fallthru
      _
    // Predicated region
    $region6: #{tpu_custom_call.1} parent=1 // pred_check
      _
    $region7: #{tpu_custom_call.1} parent=1 // pred_check_branch
      %18 = sbr.rel (0) target = $region9
    $region8: #{tpu_custom_call.1} parent=1 // pred_region
      _
    $region9: #{tpu_custom_call.1} parent=1 // pred_fallthru
      _
    // Predicated region
    $region10: #{tpu_custom_call.1} parent=1 // pred_check
      _
    $region11: #{tpu_custom_call.1} parent=1 // pred_check_branch
      %20 = sbr.rel (0) target = $region13
    $region12: #{tpu_custom_call.1} parent=1 // pred_region
      _
    $region13: #{tpu_custom_call.1} parent=1 // pred_fallthru
      _
    // Predicated region
    $region14: #{tpu_custom_call.1} parent=1 // pred_check
      _
    $region15: #{tpu_custom_call.1} parent=1 // pred_check_branch
      %22 = sbr.rel (0) target = $region17
    $region16: #{tpu_custom_call.1} parent=1 // pred_region
      _
    $region17: #{tpu_custom_call.1} parent=1 // pred_fallthru
      _
    // Predicated region
    $region18: #{tpu_custom_call.1} parent=1 // pred_check
      _
    $region19: #{tpu_custom_call.1} parent=1 // pred_check_branch
      %24 = sbr.rel (0) target = $region21
    $region20: #{tpu_custom_call.1} parent=1 // pred_region
      _
    $region21: #{tpu_custom_call.1} parent=1 // pred_fallthru
      _
    // Predicated region
    $region22: #{tpu_custom_call.1} parent=1 // pred_check
      _
    $region23: #{tpu_custom_call.1} parent=1 // pred_check_branch
      %26 = sbr.rel (0) target = $region25
    $region24: #{tpu_custom_call.1} parent=1 // pred_region
      _
    $region25: #{tpu_custom_call.1} parent=1 // pred_fallthru
      _
    // Predicated region
    $region26: #{tpu_custom_call.1} parent=1 // pred_check
      _
    $region27: #{tpu_custom_call.1} parent=1 // pred_check_branch
      %28 = sbr.rel (0) target = $region29
    $region28: #{tpu_custom_call.1} parent=1 // pred_region
      _
    $region29: #{tpu_custom_call.1} parent=1 // pred_fallthru
      _
    %v29 = vld [vmem:[%s0] sm:$0xff]
    %v30 = vld [vmem:[%s1] sm:$0xff]
    %v31 = vld [vmem:[%s1 + $0x8] sm:$0xff]
    %v32 = vld [vmem:[%s1 + $0x10] sm:$0xff]
    %v33 = vld [vmem:[%s1 + $0x18] sm:$0xff]
    %vm34 = vcmask 261120
    %v36 = vsel %vm34, %v29, 0
    %38 = vmatpush.msra.mxu0 0.0
    %39 = vmatpush.msra.mxu0 0.0
    %40 = vmatpush.msra.mxu0 0.0
    %41 = vmatpush.msra.mxu0 0.0
    %42 = vmatpush.msra.mxu0 0.0
    %43 = vmatpush.msra.mxu0 0.0
    %44 = vmatpush.msra.mxu0 0.0
    %45 = vmatpush.msra.mxu0 0.0
    %46 = vmatpush.msra.mxu0 0.0
    %47 = vmatpush.msra.mxu0 0.0
    %48 = vmatpush.msra.mxu0 0.0
    %49 = vmatpush.msra.mxu0 0.0
    %50 = vmatpush.msra.mxu0 %v33
    %51 = vmatpush.msra.mxu0 %v32
    %52 = vmatpush.msra.mxu0 %v31
    %53 = vmatpush.msra.mxu0 %v30
    %54 = vmatmul.f32.gmra.mxu0 %v36
    %v55 = vpop.f32.mrf.mxu0
    %v56 = vadd.f32 0.0, %v55
    %57 = vdwg.mxu0
    %v58 = vld [vmem:[%s2] sm:$0x3]
    %vm59 = vcmask 523264
    %v60 = vsel %vm59, %v56, 0.0
    %v61 = vrot.slane %v60, 4
    %v62 = vadd.f32 %v60, %v61
    %v63 = vrot.slane %v62, 2
    %v64 = vadd.f32 %v62, %v63
    %v65 = vrot.slane %v64, 1
    %v66 = vadd.f32 %v64, %v65
    %v67 = vrcp.pop 8.0
    %v68 = vmul.f32 8.0, %v67
    %v69 = vsub.f32 1.0, %v68
    %v70 = vmul.f32 %v67, %v69
    %v71 = vadd.f32 %v67, %v70
    %vm72 = vweird.f32 %v67
    %v73 = vsel %vm72, %v67, %v71
    %v74 = vmul.f32 %v66, %v73
    %v75 = vmul.f32 %v56, %v56
    %v76 = vsel %vm59, %v75, 0.0
    %v77 = vrot.slane %v76, 4
    %v78 = vadd.f32 %v76, %v77
    %v79 = vrot.slane %v78, 2
    %v80 = vadd.f32 %v78, %v79
    %v81 = vrot.slane %v80, 1
    %v82 = vadd.f32 %v80, %v81
    %v83 = vmul.f32 %v82, %v73
    %v84 = vmul.f32 %v74, %v74
    %v85 = vsub.f32 %v83, %v84
    %v86 = vadd.f32 %v85, 1e-05
    %v87 = vrsqrt.pop %v86
    %v88 = vmul.f32 %v87, %v86
    %v89 = vmul.f32 %v88, %v87
    %v90 = vmul.f32 0.5, %v89
    %v91 = vsub.f32 1.5, %v90
    %v92 = vmul.f32 %v87, %v91
    %vm93 = vweird.f32 %v86
    %vm94 = vweird.f32 %v87
    %vm95 = vmor %vm93, %vm94
    %v96 = vsel %vm95, %v87, %v92
    %v97 = vmul.f32 %v58, %v96
    %v98 = vmul.f32 %v74, %v97
    %v100 = vrot.slane %v98, 7
    %v102 = vsub.f32 %v58, %v100
    %v103 = vperm.slane %v97, 0
    %v104 = vmul.f32 %v56, %v103
    %v105 = vperm.slane %v102, 1
    %v106 = vadd.f32 %v104, %v105
    %vm107 = vcmp.gt.f32.partialorder %v106, 0.0
    %v108 = vmul.f32 %v106, 0.01
    %v109 = vsel %vm107, %v106, %v108
    %v110 = vld [vmem:[%s3] sm:$0xff]
    %v111 = vld [vmem:[%s3 + $0x8] sm:$0xff]
    %v112 = vld [vmem:[%s3 + $0x10] sm:$0xff]
    %v113 = vld [vmem:[%s3 + $0x18] sm:$0xff]
    %v114 = vld [vmem:[%s3 + $0x20] sm:$0xff]
    %v115 = vld [vmem:[%s3 + $0x28] sm:$0xff]
    %v116 = vld [vmem:[%s3 + $0x30] sm:$0xff]
    %v117 = vld [vmem:[%s3 + $0x38] sm:$0xff]
    %v119 = vsel %vm59, %v109, 0
    %121 = vmatpush.msra.mxu0 0.0
    %122 = vmatpush.msra.mxu0 0.0
    %123 = vmatpush.msra.mxu0 0.0
    %124 = vmatpush.msra.mxu0 0.0
    %125 = vmatpush.msra.mxu0 0.0
    %126 = vmatpush.msra.mxu0 0.0
    %127 = vmatpush.msra.mxu0 0.0
    %128 = vmatpush.msra.mxu0 0.0
    %129 = vmatpush.msra.mxu0 %v117
    %130 = vmatpush.msra.mxu0 %v116
    %131 = vmatpush.msra.mxu0 %v115
    %132 = vmatpush.msra.mxu0 %v114
    %133 = vmatpush.msra.mxu0 %v113
    %134 = vmatpush.msra.mxu0 %v112
    %135 = vmatpush.msra.mxu0 %v111
    %136 = vmatpush.msra.mxu0 %v110
    %137 = vmatmul.f32.gmra.mxu0 %v119
    %v138 = vpop.f32.mrf.mxu0
    %v139 = vadd.f32 0.0, %v138
    %140 = vdwg.mxu0
    %v141 = vld [vmem:[%s4] sm:$0x3]
    %v142 = vsel %vm34, %v139, 0.0
    %v143 = vrot.slane %v142, 4
    %v144 = vadd.f32 %v142, %v143
    %v145 = vrot.slane %v144, 2
    %v146 = vadd.f32 %v144, %v145
    %v147 = vrot.slane %v146, 1
    %v148 = vadd.f32 %v146, %v147
    %v149 = vmul.f32 %v148, %v73
    %v150 = vmul.f32 %v139, %v139
    %v151 = vsel %vm34, %v150, 0.0
    %v152 = vrot.slane %v151, 4
    %v153 = vadd.f32 %v151, %v152
    %v154 = vrot.slane %v153, 2
    %v155 = vadd.f32 %v153, %v154
    %v156 = vrot.slane %v155, 1
    %v157 = vadd.f32 %v155, %v156
    %v158 = vmul.f32 %v157, %v73
    %v159 = vmul.f32 %v149, %v149
    %v160 = vsub.f32 %v158, %v159
    %v161 = vadd.f32 %v160, 1e-05
    %v162 = vrsqrt.pop %v161
    %v163 = vmul.f32 %v162, %v161
    %v164 = vmul.f32 %v163, %v162
    %v165 = vmul.f32 0.5, %v164
    %v166 = vsub.f32 1.5, %v165
    %v167 = vmul.f32 %v162, %v166
    %vm168 = vweird.f32 %v161
    %vm169 = vweird.f32 %v162
    %vm170 = vmor %vm168, %vm169
    %v171 = vsel %vm170, %v162, %v167
    %v172 = vmul.f32 %v141, %v171
    %v173 = vmul.f32 %v149, %v172
    %v175 = vrot.slane %v173, 7
    %v177 = vsub.f32 %v141, %v175
    %v178 = vperm.slane %v172, 0
    %v179 = vmul.f32 %v139, %v178
    %v180 = vperm.slane %v177, 1
    %v181 = vadd.f32 %v179, %v180
    %vm182 = vcmp.gt.f32.partialorder %v181, 0.0
    %v183 = vmul.f32 %v181, 0.01
    %v184 = vsel %vm182, %v181, %v183
    %v185 = vld [vmem:[%s5] sm:$0x1]
    %v186 = vld [vmem:[#allocation2] sm:$0x1]
    %188 = vset.pattern.permute.xlu0 0
    %189 = vperm.xlu0 %188, %v186
    %v190 = vpop.permute.xlu0 %189
    %v192 = vperm.slane %v190, 0
    %v194 = vsel %vm34, %v185, 0
    %v197 = vsel %vm34, %v184, 0
    %199 = vmatpush.xpose.msra.mxu0 0.0
    %200 = vmatpush.xpose.msra.mxu0 0.0
    %201 = vmatpush.xpose.msra.mxu0 0.0
    %202 = vmatpush.xpose.msra.mxu0 0.0
    %203 = vmatpush.xpose.msra.mxu0 0.0
    %204 = vmatpush.xpose.msra.mxu0 0.0
    %205 = vmatpush.xpose.msra.mxu0 0.0
    %206 = vmatpush.xpose.msra.mxu0 0.0
    %207 = vmatpush.xpose.msra.mxu0 0.0
    %208 = vmatpush.xpose.msra.mxu0 0.0
    %209 = vmatpush.xpose.msra.mxu0 0.0
    %210 = vmatpush.xpose.msra.mxu0 0.0
    %211 = vmatpush.xpose.msra.mxu0 0.0
    %212 = vmatpush.xpose.msra.mxu0 0.0
    %213 = vmatpush.xpose.msra.mxu0 0.0
    %214 = vmatpush.xpose.msra.mxu0 %v197
    %215 = vmatmul.f32.gmra.mxu0 %v194
    %v216 = vpop.f32.mrf.mxu0
    %v217 = vadd.f32 %v192, %v216
    %218 = vdwg.mxu0
    %vm219 = vcmask 57344
    %220 = vst.msk [vmem:[#allocation3] sm:$0x1] %vm219, %v217
    // Predicated region
    $region30: #{tpu_custom_call.1} parent=1 // pred_check
      _
    $region31: #{tpu_custom_call.1} parent=1 // pred_check_branch
      %222 = sbr.rel (0) target = $region33
    $region32: #{tpu_custom_call.1} parent=1 // pred_region
      %224 = vsyncadd [#allocation4], 0
      %s226 = sshll.u32 [#allocation3], 4
      %s227 = int_to_ptr.vmem [resolvable:$true] %s226
      %s228 = sshll.u32 %s7, 4
      %s229 = int_to_ptr.hbm [resolvable:$true] %s228
      %231 = dma.vmem_to_hbm [thread:$0]  %s227, 16, %s229, [#allocation4]
    $region33: #{tpu_custom_call.1} parent=1 // pred_fallthru
      _
    // Predicated region
    $region34: #{tpu_custom_call.1} parent=1 // pred_check
      _
    $region35: #{tpu_custom_call.1} parent=1 // pred_check_branch
      %233 = sbr.rel (0) target = $region37
    $region36: #{tpu_custom_call.1} parent=1 // pred_region
      %235 = dma.done [#allocation4], 16
    $region37: #{tpu_custom_call.1} parent=1 // pred_fallthru
      _
    %236 = vsyncpa [#allocation4], 1

</llo_original>
